<compile_context>
chip_gen: v5e
topology: v5e:2x2
jax: 0.10.0
libtpu: 0.0.40
codegen_flags: <defaults>
</compile_context>

<pallas_src>
import math
import functools

import jax
import jax.numpy as jnp
from jax import lax
from jax.experimental import pallas as pl
from jax.experimental.pallas import tpu as pltpu


def _attention_head_kernel(x_ref, wqkv_ref, bqkv_ref, o_ref, *,
                           head_dim, group_stride, lane_dense):
    x = x_ref[...]                                   # (Bb, S, E)
    Bb, S, E = x.shape
    H, Hp = head_dim, group_stride

    # MXU operands follow the fused weight dtype (bf16 at realistic sizes), f32 accumulate.
    cd = wqkv_ref.dtype
    xf = x.reshape(Bb * S, E).astype(cd)

    # --- fused QKV projection: one MXU matmul over the flattened (Bb*S, E) slab ---
    qkv = jnp.dot(xf, wqkv_ref[...], preferred_element_type=jnp.float32)
    qkv = qkv + bqkv_ref[...].astype(jnp.float32)    # (Bb*S, 3*Hp), bias broadcast over rows
    qkv = qkv.reshape(Bb, S, 3 * Hp)

    scale = 1.0 / math.sqrt(H)
    q = qkv[..., 0:H] * scale                        # fold 1/sqrt(d) into q: S*H muls, not S*S
    k = qkv[..., Hp:Hp + H]
    v = qkv[..., 2 * Hp:2 * Hp + H]

    # --- scores = (q * scale) @ k^T without materializing k.T (batched dot_general) ---
    s = lax.dot_general(
        q, k,
        dimension_numbers=(((2,), (2,)), ((0,), (0,))),
        preferred_element_type=jnp.float32)          # (Bb, S, S)

    # numerically stable softmax over the last axis, kept in f32
    m = jnp.max(s, axis=-1, keepdims=True)
    p = jnp.exp(s - m)
    d = jnp.sum(p, axis=-1, keepdims=True)
    r = pl.reciprocal(d, approx=True)                # EUP reciprocal: off the VALU slots
    r = r * (2.0 - d * r)                            # one Newton step -> ~f32-exact, one VPU op/row
    p = p * r

    # --- out = p @ v (batched); MXU operands in compute dtype, f32 accumulation ---
    out = lax.dot_general(
        p.astype(cd), v.astype(cd),
        dimension_numbers=(((2,), (1,)), ((0,), (0,))),
        preferred_element_type=jnp.float32)          # (Bb, S, H)

    if lane_dense:
        # Lane-dense store: (Bb, S*H) slab whose last dim is a multiple of 128 -> unmasked vst.
        o_ref[...] = out.reshape(Bb, S * H).astype(o_ref.dtype)
    else:
        o_ref[...] = out.astype(o_ref.dtype)


def fuse_qkv_params(wq, wk, wv, bq, bk, bv, *, compute_dtype=None):
    """Fuse the q/k/v Linear params into one (E, 3*Hp) weight / (1, 3*Hp) bias.

    Call ONCE at module setup, NOT per forward call: doing it per call costs a full extra
    HBM read+write of the weights before every kernel launch.

    Weights arrive pre-transposed as (E, H) (PyTorch Linear stores (H, E)).  Pass
    compute_dtype=jnp.bfloat16 at realistic sizes so the kernel's MXU matmuls run in bf16.
    """
    E, H = wq.shape
    # 128-lane-align each Q/K/V column group once H >= 128 so the in-kernel q/k/v slices
    # are whole (8,128) tiles; below 128 padding would only waste MXU columns.
    Hp = H if H < 128 else ((H + 127) // 128) * 128

    def padw(w):
        return w if Hp == H else jnp.pad(w, ((0, 0), (0, Hp - H)))

    def padb(b):
        return b if Hp == H else jnp.pad(b, ((0, Hp - H),))

    wqkv = jnp.concatenate([padw(wq), padw(wk), padw(wv)], axis=1)            # (E, 3*Hp)
    bqkv = jnp.concatenate([padb(bq), padb(bk), padb(bv)]).reshape(1, 3 * Hp)  # (1, 3*Hp)
    if compute_dtype is not None:
        wqkv = wqkv.astype(compute_dtype)
        bqkv = bqkv.astype(compute_dtype)
    return wqkv, bqkv


@functools.partial(jax.jit, static_argnames=("head_dim", "batch_block"))
def attention_head_fused(hidden_state, wqkv, bqkv, *, head_dim, batch_block=None):
    """hidden_state: (B, S, E); wqkv: (E, 3*Hp); bqkv: (1, 3*Hp)  ->  (B, S, head_dim)."""
    B, S, E = hidden_state.shape
    Hp = wqkv.shape[1] // 3
    H = head_dim

    # Whole batch per grid step at small sizes (per-step overhead ~0.35us dominates).
    # On v7x with large per-step work, pass batch_block=ceil(B/2) to shard across its 2 TCs.
    if batch_block is None:
        batch_block = B

    lane_dense = (S * H) % 128 == 0
    kernel = functools.partial(_attention_head_kernel, head_dim=H,
                               group_stride=Hp, lane_dense=lane_dense)

    if lane_dense:
        out_shape = jax.ShapeDtypeStruct((B, S * H), hidden_state.dtype)
        out_spec = pl.BlockSpec((batch_block, S * H), lambda b: (b, 0))
    else:
        out_shape = jax.ShapeDtypeStruct((B, S, H), hidden_state.dtype)
        out_spec = pl.BlockSpec((batch_block, S, H), lambda b: (b, 0, 0))

    out = pl.pallas_call(
        kernel,
        out_shape=out_shape,
        grid_spec=pltpu.PrefetchScalarGridSpec(
            num_scalar_prefetch=0,
            grid=(pl.cdiv(B, batch_block),),
            in_specs=[
                pl.BlockSpec((batch_block, S, E), lambda b: (b, 0, 0)),
                # Constant-index weight/bias blocks stay VMEM-resident across steps.
                # For v7x scale-up (64 MiB VMEM, transformer-sized E/3H), switch these two
                # specs to pipeline_mode=pl.Buffered(1) to drop the default 2-deep
                # buffering of a never-changing block.
                pl.BlockSpec((E, 3 * Hp), lambda b: (0, 0)),
                pl.BlockSpec((1, 3 * Hp), lambda b: (0, 0)),
            ],
            out_specs=out_spec,
        ),
        compiler_params=pltpu.CompilerParams(
            dimension_semantics=("parallel",)),
    )(hidden_state, wqkv, bqkv)

    if lane_dense:
        out = out.reshape(B, S, H)   # free metadata reshape back in the (jitted) wrapper
    return out


def _reference(hidden_state, wq, wk, wv, bq, bk, bv):
    q = hidden_state @ wq + bq
    k = hidden_state @ wk + bk
    v = hidden_state @ wv + bv
    scores = jnp.einsum("bqd,bkd->bqk", q, k) / math.sqrt(q.shape[-1])
    p = jax.nn.softmax(scores, axis=-1)
    return jnp.einsum("bqk,bkd->bqd", p, v)


if __name__ == "__main__":
    B, S, E, H = 2, 8, 32, 16  # batch, seq, embed_dim, head_dim

    key = jax.random.PRNGKey(0)
    kx, kq, kk, kv, kbq, kbk, kbv = jax.random.split(key, 7)

    x = jax.random.normal(kx, (B, S, E), dtype=jnp.float32)

    # Deterministic Linear params (PyTorch Linear: weight (H, E), bias (H));
    # stored here transposed as (E, H) for x @ W.
    bound = 1.0 / math.sqrt(E)
    wq = jax.random.uniform(kq, (E, H), jnp.float32, -bound, bound)
    wk = jax.random.uniform(kk, (E, H), jnp.float32, -bound, bound)
    wv = jax.random.uniform(kv, (E, H), jnp.float32, -bound, bound)
    bq = jax.random.uniform(kbq, (H,), jnp.float32, -bound, bound)
    bk = jax.random.uniform(kbk, (H,), jnp.float32, -bound, bound)
    bv = jax.random.uniform(kbv, (H,), jnp.float32, -bound, bound)

    # One-time setup: hoisted out of the per-call path (perf review item 1).
    # At realistic sizes pass compute_dtype=jnp.bfloat16 to run the MXU in bf16.
    wqkv, bqkv = fuse_qkv_params(wq, wk, wv, bq, bk, bv)

    out = attention_head_fused(x, wqkv, bqkv, head_dim=H)
    out = jax.block_until_ready(out)

    ref = _reference(x, wq, wk, wv, bq, bk, bv)
    assert out.shape == (B, S, H)
    # Newton-refined EUP reciprocal + f32 MXU operands -> tight tolerance now suffices.
    assert jnp.allclose(out, ref, atol=1e-3, rtol=1e-3), "mismatch vs reference"

    print("KERNEL_OK")
</pallas_src>

<mosaic_0001>
module attributes {stable_mosaic.version = 11 : i64} {
  func.func @_attention_head_kernel(%arg0: i32, %arg1: memref<2x8x32xf32, #tpu.memory_space<vmem>>, %arg2: memref<32x48xf32, #tpu.memory_space<vmem>>, %arg3: memref<1x48xf32, #tpu.memory_space<vmem>>, %arg4: memref<2x128xf32, #tpu.memory_space<vmem>>) attributes {dimension_semantics = [#tpu.dimension_semantics<parallel>], iteration_bounds = array<i64: 1>, scalar_prefetch = 0 : i64, scratch_operands = 0 : i64, tpu.core_type = #tpu.core_type<tc>, window_params = [{transform_indices = @transform_0, window_bounds = array<i64: 2, 8, 32>}, {pipeline_mode = #tpu.pipeline_mode<synchronous>, transform_indices = @transform_1, window_bounds = array<i64: 32, 48>}, {pipeline_mode = #tpu.pipeline_mode<synchronous>, transform_indices = @transform_2, window_bounds = array<i64: 1, 48>}, {transform_indices = @transform_3, window_bounds = array<i64: 2, 128>}]} {
    %c0 = arith.constant 0 : index
    %c0_0 = arith.constant 0 : index
    %c0_1 = arith.constant 0 : index
    %0 = vector.load %arg1[%c0, %c0_0, %c0_1] : memref<2x8x32xf32, #tpu.memory_space<vmem>>, vector<2x8x32xf32>
    %1 = vector.shape_cast %0 : vector<2x8x32xf32> to vector<16x32xf32>
    %c0_2 = arith.constant 0 : index
    %c0_3 = arith.constant 0 : index
    %2 = vector.load %arg2[%c0_2, %c0_3] : memref<32x48xf32, #tpu.memory_space<vmem>>, vector<32x48xf32>
    %cst = arith.constant dense<0.000000e+00> : vector<16x48xf32>
    %3 = tpu.matmul %1, %2, %cst {dimension_numbers = #tpu.dot_dimension_numbers<[1], [0], [0], [1], [0, 0, 1, 1], [], []>} : vector<16x32xf32>, vector<32x48xf32>, vector<16x48xf32> -> vector<16x48xf32>
    %c0_4 = arith.constant 0 : index
    %c0_5 = arith.constant 0 : index
    %4 = vector.load %arg3[%c0_4, %c0_5] : memref<1x48xf32, #tpu.memory_space<vmem>>, vector<1x48xf32>
    %5 = vector.broadcast %4 : vector<1x48xf32> to vector<16x48xf32>
    %6 = arith.addf %3, %5 : vector<16x48xf32>
    %7 = vector.shape_cast %6 : vector<16x48xf32> to vector<2x8x48xf32>
    %8 = vector.extract_strided_slice %7 {offsets = [0, 0, 0], sizes = [2, 8, 16], strides = [1, 1, 1]} : vector<2x8x48xf32> to vector<2x8x16xf32>
    %cst_6 = arith.constant 2.500000e-01 : f32
    %9 = vector.broadcast %cst_6 : f32 to vector<2x8x16xf32>
    %10 = arith.mulf %8, %9 : vector<2x8x16xf32>
    %11 = vector.extract_strided_slice %7 {offsets = [0, 0, 16], sizes = [2, 8, 16], strides = [1, 1, 1]} : vector<2x8x48xf32> to vector<2x8x16xf32>
    %12 = vector.extract_strided_slice %7 {offsets = [0, 0, 32], sizes = [2, 8, 16], strides = [1, 1, 1]} : vector<2x8x48xf32> to vector<2x8x16xf32>
    %cst_7 = arith.constant dense<0.000000e+00> : vector<2x8x8xf32>
    %13 = tpu.matmul %10, %11, %cst_7 {dimension_numbers = #tpu.dot_dimension_numbers<[2], [2], [1], [1], [0, 0, 0, 1, 1, 1], [0], [0]>} : vector<2x8x16xf32>, vector<2x8x16xf32>, vector<2x8x8xf32> -> vector<2x8x8xf32>
    %cst_8 = arith.constant dense<0xFF800000> : vector<2x8xf32>
    %14 = vector.multi_reduction <maximumf>, %13, %cst_8 [2] : vector<2x8x8xf32> to vector<2x8xf32>
    %15 = vector.shape_cast %14 : vector<2x8xf32> to vector<2x8x1xf32>
    %16 = vector.broadcast %15 : vector<2x8x1xf32> to vector<2x8x8xf32>
    %17 = arith.subf %13, %16 : vector<2x8x8xf32>
    %18 = math.exp %17 : vector<2x8x8xf32>
    %cst_9 = arith.constant dense<0.000000e+00> : vector<2x8xf32>
    %19 = vector.multi_reduction <add>, %18, %cst_9 [2] : vector<2x8x8xf32> to vector<2x8xf32>
    %20 = vector.shape_cast %19 : vector<2x8xf32> to vector<2x8x1xf32>
    %21 = tpu.reciprocal %20 {approx = true} : vector<2x8x1xf32> -> vector<2x8x1xf32>
    %22 = arith.mulf %20, %21 : vector<2x8x1xf32>
    %cst_10 = arith.constant 2.000000e+00 : f32
    %23 = vector.broadcast %cst_10 : f32 to vector<2x8x1xf32>
    %24 = arith.subf %23, %22 : vector<2x8x1xf32>
    %25 = arith.mulf %21, %24 : vector<2x8x1xf32>
    %26 = vector.broadcast %25 : vector<2x8x1xf32> to vector<2x8x8xf32>
    %27 = arith.mulf %18, %26 : vector<2x8x8xf32>
    %cst_11 = arith.constant dense<0.000000e+00> : vector<2x8x16xf32>
    %28 = tpu.matmul %27, %12, %cst_11 {dimension_numbers = #tpu.dot_dimension_numbers<[2], [1], [1], [2], [0, 0, 0, 1, 1, 2], [0], [0]>} : vector<2x8x8xf32>, vector<2x8x16xf32>, vector<2x8x16xf32> -> vector<2x8x16xf32>
    %29 = vector.shape_cast %28 : vector<2x8x16xf32> to vector<2x128xf32>
    %c0_12 = arith.constant 0 : index
    %c0_13 = arith.constant 0 : index
    %30 = vector.load %arg4[%c0_12, %c0_13] : memref<2x128xf32, #tpu.memory_space<vmem>>, vector<2x128xf32>
    tpu.vector_store %arg4[%c0_12, %c0_13], %29 {strides = array<i32>} : memref<2x128xf32, #tpu.memory_space<vmem>>, vector<2x128xf32>,
    return
  }
  func.func @transform_0(%arg0: i32) -> (i32, i32, i32) {
    %c0_i32 = arith.constant 0 : i32
    %c0_i32_0 = arith.constant 0 : i32
    %c0_i32_1 = arith.constant 0 : i32
    return %arg0, %c0_i32, %c0_i32_0 : i32, i32, i32
  }
  func.func @transform_1(%arg0: i32) -> (i32, i32) {
    %c0_i32 = arith.constant 0 : i32
    %c0_i32_0 = arith.constant 0 : i32
    %c0_i32_1 = arith.constant 0 : i32
    return %c0_i32, %c0_i32_0 : i32, i32
  }
  func.func @transform_2(%arg0: i32) -> (i32, i32) {
    %c0_i32 = arith.constant 0 : i32
    %c0_i32_0 = arith.constant 0 : i32
    %c0_i32_1 = arith.constant 0 : i32
    return %c0_i32, %c0_i32_0 : i32, i32
  }
  func.func @transform_3(%arg0: i32) -> (i32, i32) {
    %c0_i32 = arith.constant 0 : i32
    %c0_i32_0 = arith.constant 0 : i32
    return %arg0, %c0_i32 : i32, i32
  }
}

</mosaic_0001>

<llo_original>
// kernel: attention_head_fused.1
$region0: #{attention_head_fused.1}
  #allocation0 [shape = 'u32[]', space=smem, size = 0x4, offset = 0x4, fixed_abs, tag = 'smem constant byte address 0x4 - core index']
  #allocation1 [shape = 'u32[72,128]{1,0:T(1,128)}', space=vmem, size = 0x9000, scoped, tag = 'internal scratch']
  %s0 = inlined_call_operand.hbm [shape: f32[2,8,32], index: 0, kind: input, shape index: {}]
  %s1 = inlined_call_operand.hbm [shape: f32[32,48], index: 1, kind: input, shape index: {}]
  %s2 = inlined_call_operand.vmem [shape: f32[1,48], index: 2, kind: input, shape index: {}]
  %s3 = inlined_call_operand.vmem [shape: f32[2,128], index: 3, kind: output, shape index: {}]
  %s4 = sld [smem:[#allocation0]]
  $region30: #{attention_head_fused.1} parent=0
    _
  %s6 = ssub.s32 1, %s4
  %s7 = scalar_select 0, %s6, %s4
  $region1: #{attention_head_fused.1} parent=0
    #allocation2 [shape = 'u8[8192]{0}', space=vmem, size = 0x2000, scoped, tag = 'input window, operand 0, single buffered']
    #allocation3 [shape = 's32[1]{0}', space=sflag, size = 0x4, scoped, tag = 'scoped memory for attention_head_fused.1']
    #allocation4 [shape = 'u8[16384]{0}', space=vmem, size = 0x4000, scoped, tag = 'input window, operand 1, single buffered']
    #allocation5 [shape = 's32[1]{0}', space=sflag, size = 0x4, scoped, tag = 'scoped memory for attention_head_fused.1']
    %8 = vsyncpa [#allocation3], 0
    %9 = vsyncpa [#allocation5], 0
    // Predicated region
    $region2: #{attention_head_fused.1} parent=1 // pred_check
      _
    $region3: #{attention_head_fused.1} parent=1 // pred_check_branch
      %11 = sbr.rel (0) target = $region5
    $region4: #{attention_head_fused.1} parent=1 // pred_region
      %13 = vsyncadd [#allocation3], 0
      %s14 = sshll.u32 %s0, 4
      %s15 = int_to_ptr.hbm [resolvable:$true] %s14
      %s16 = sshll.u32 [#allocation2], 4
      %s17 = int_to_ptr.vmem [resolvable:$true] %s16
      %22 = dma.hbm_to_vmem [thread:$0]  %s15, 256, %s17, [#allocation3], 128, 128, 8
    $region5: #{attention_head_fused.1} parent=1 // pred_fallthru
      _
    // Predicated region
    $region6: #{attention_head_fused.1} parent=1 // pred_check
      _
    $region7: #{attention_head_fused.1} parent=1 // pred_check_branch
      %24 = sbr.rel (0) target = $region9
    $region8: #{attention_head_fused.1} parent=1 // pred_region
      %26 = vsyncadd [#allocation5], 0
      %s27 = sshll.u32 %s1, 4
      %s28 = int_to_ptr.hbm [resolvable:$true] %s27
      %s29 = sshll.u32 [#allocation4], 4
      %s30 = int_to_ptr.vmem [resolvable:$true] %s29
      %35 = dma.hbm_to_vmem [thread:$0]  %s28, 512, %s30, [#allocation5], 128, 128, 8
    $region9: #{attention_head_fused.1} parent=1 // pred_fallthru
      _
    // Predicated region
    $region10: #{attention_head_fused.1} parent=1 // pred_check
      _
    $region11: #{attention_head_fused.1} parent=1 // pred_check_branch
      %37 = sbr.rel (0) target = $region13
    $region12: #{attention_head_fused.1} parent=1 // pred_region
      _
    $region13: #{attention_head_fused.1} parent=1 // pred_fallthru
      _
    // Predicated region
    $region14: #{attention_head_fused.1} parent=1 // pred_check
      _
    $region15: #{attention_head_fused.1} parent=1 // pred_check_branch
      %39 = sbr.rel (0) target = $region17
    $region16: #{attention_head_fused.1} parent=1 // pred_region
      %41 = dma.done [#allocation3], 256
    $region17: #{attention_head_fused.1} parent=1 // pred_fallthru
      _
    // Predicated region
    $region18: #{attention_head_fused.1} parent=1 // pred_check
      _
    $region19: #{attention_head_fused.1} parent=1 // pred_check_branch
      %43 = sbr.rel (0) target = $region21
    $region20: #{attention_head_fused.1} parent=1 // pred_region
      %45 = dma.done [#allocation5], 512
    $region21: #{attention_head_fused.1} parent=1 // pred_fallthru
      _
    %v46 = vld [vmem:[#allocation2] sm:$0xff]
    %v47 = vld [vmem:[#allocation2 + $0x8] sm:$0xff]
    %v48 = vld [vmem:[#allocation4] sm:$0xff]
    %v49 = vld [vmem:[#allocation4 + $0x8] sm:$0xff]
    %v50 = vld [vmem:[#allocation4 + $0x10] sm:$0xff]
    %v51 = vld [vmem:[#allocation4 + $0x18] sm:$0xff]
    %v52 = vld [vmem:[%s2] sm:$0x1]
    %v54 = vperm.slane %v52, 0
    %vm56 = vcmask 261120
    %v58 = vsel %vm56, %v46, 0
    %v61 = vsel %vm56, %v47, 0
    %63 = vmatpush.msra.mxu0 0.0
    %64 = vmatpush.msra.mxu0 0.0
    %65 = vmatpush.msra.mxu0 0.0
    %66 = vmatpush.msra.mxu0 0.0
    %67 = vmatpush.msra.mxu0 0.0
    %68 = vmatpush.msra.mxu0 0.0
    %69 = vmatpush.msra.mxu0 0.0
    %70 = vmatpush.msra.mxu0 0.0
    %71 = vmatpush.msra.mxu0 0.0
    %72 = vmatpush.msra.mxu0 0.0
    %73 = vmatpush.msra.mxu0 0.0
    %74 = vmatpush.msra.mxu0 0.0
    %75 = vmatpush.msra.mxu0 %v51
    %76 = vmatpush.msra.mxu0 %v50
    %77 = vmatpush.msra.mxu0 %v49
    %78 = vmatpush.msra.mxu0 %v48
    %79 = vmatmul.f32.gmra.mxu0 %v58
    %v80 = vpop.f32.mrf.mxu0
    %v81 = vadd.f32 %v54, %v80
    %82 = vmatmul.f32.gmra.mxu0 %v61
    %v83 = vpop.f32.mrf.mxu0
    %v84 = vadd.f32 %v54, %v83
    %85 = vdwg.mxu0
    %v86 = vmul.f32 %v81, 0.25
    %v87 = vmul.f32 %v84, 0.25
    %89 = vrot.lane.b32.xlu0 %v81, 112
    %v90 = vpop.permute.xlu0 %89
    %vm91 = vcmask 130048
    %v93 = vsel %vm91, %v86, 0
    %v95 = vsel %vm91, %v90, 0
    %97 = vmatpush.xpose.msra.mxu0 0.0
    %98 = vmatpush.xpose.msra.mxu0 0.0
    %99 = vmatpush.xpose.msra.mxu0 0.0
    %100 = vmatpush.xpose.msra.mxu0 0.0
    %101 = vmatpush.xpose.msra.mxu0 0.0
    %102 = vmatpush.xpose.msra.mxu0 0.0
    %103 = vmatpush.xpose.msra.mxu0 0.0
    %104 = vmatpush.xpose.msra.mxu0 0.0
    %105 = vmatpush.xpose.msra.mxu0 0.0
    %106 = vmatpush.xpose.msra.mxu0 0.0
    %107 = vmatpush.xpose.msra.mxu0 0.0
    %108 = vmatpush.xpose.msra.mxu0 0.0
    %109 = vmatpush.xpose.msra.mxu0 0.0
    %110 = vmatpush.xpose.msra.mxu0 0.0
    %111 = vmatpush.xpose.msra.mxu0 0.0
    %112 = vmatpush.xpose.msra.mxu0 %v95
    %113 = vmatmul.f32.gmra.mxu0 %v93
    %v114 = vpop.f32.mrf.mxu0
    %v115 = vadd.f32 0.0, %v114
    %116 = vdwg.mxu0
    %118 = vrot.lane.b32.xlu0 %v84, 112
    %v119 = vpop.permute.xlu0 %118
    %v121 = vsel %vm91, %v87, 0
    %v123 = vsel %vm91, %v119, 0
    %125 = vmatpush.xpose.msra.mxu0 0.0
    %126 = vmatpush.xpose.msra.mxu0 0.0
    %127 = vmatpush.xpose.msra.mxu0 0.0
    %128 = vmatpush.xpose.msra.mxu0 0.0
    %129 = vmatpush.xpose.msra.mxu0 0.0
    %130 = vmatpush.xpose.msra.mxu0 0.0
    %131 = vmatpush.xpose.msra.mxu0 0.0
    %132 = vmatpush.xpose.msra.mxu0 0.0
    %133 = vmatpush.xpose.msra.mxu0 0.0
    %134 = vmatpush.xpose.msra.mxu0 0.0
    %135 = vmatpush.xpose.msra.mxu0 0.0
    %136 = vmatpush.xpose.msra.mxu0 0.0
    %137 = vmatpush.xpose.msra.mxu0 0.0
    %138 = vmatpush.xpose.msra.mxu0 0.0
    %139 = vmatpush.xpose.msra.mxu0 0.0
    %140 = vmatpush.xpose.msra.mxu0 %v123
    %141 = vmatmul.f32.gmra.mxu0 %v121
    %v142 = vpop.f32.mrf.mxu0
    %v143 = vadd.f32 0.0, %v142
    %144 = vdwg.mxu0
    %vm145 = vcmask 64512
    %v146 = vsel %vm145, %v115, -inf
    %147 = vmax.xlane.f32.xlu0 %v146
    %v148 = vpop.xlane.xlu0 %147
    %v149 = vsel %vm145, %v143, -inf
    %150 = vmax.xlane.f32.xlu0 %v149
    %v151 = vpop.xlane.xlu0 %150
    %v152 = vsub.f32 %v115, %v148
    %v153 = vsub.f32 %v143, %v151
    %v154 = vmul.f32 %v152, 1.442695
    %v155 = vpow.pop %v154
    %v156 = vmul.f32 %v153, 1.442695
    %v157 = vpow.pop %v156
    %v158 = vsel %vm145, %v155, 0.0
    %159 = vadd.xlane.f32.xlu0 %v158
    %v160 = vpop.xlane.xlu0 %159
    %v161 = vsel %vm145, %v157, 0.0
    %162 = vadd.xlane.f32.xlu0 %v161
    %v163 = vpop.xlane.xlu0 %162
    %v164 = vrcp.pop %v160
    %v165 = vrcp.pop %v163
    %v166 = vmul.f32 %v160, %v164
    %v167 = vmul.f32 %v163, %v165
    %v168 = vsub.f32 2.0, %v166
    %v169 = vsub.f32 2.0, %v167
    %v170 = vmul.f32 %v164, %v168
    %v171 = vmul.f32 %v165, %v169
    %v172 = vmul.f32 %v155, %v170
    %v173 = vmul.f32 %v157, %v171
    %174 = vrot.lane.b32.xlu0 %v81, 96
    %v175 = vpop.permute.xlu0 %174
    %v178 = vsel %vm145, %v172, 0
    %180 = vmatpush.msra.mxu0 0.0
    %181 = vmatpush.msra.mxu0 0.0
    %182 = vmatpush.msra.mxu0 0.0
    %183 = vmatpush.msra.mxu0 0.0
    %184 = vmatpush.msra.mxu0 0.0
    %185 = vmatpush.msra.mxu0 0.0
    %186 = vmatpush.msra.mxu0 0.0
    %187 = vmatpush.msra.mxu0 0.0
    %188 = vmatpush.msra.mxu0 0.0
    %189 = vmatpush.msra.mxu0 0.0
    %190 = vmatpush.msra.mxu0 0.0
    %191 = vmatpush.msra.mxu0 0.0
    %192 = vmatpush.msra.mxu0 0.0
    %193 = vmatpush.msra.mxu0 0.0
    %194 = vmatpush.msra.mxu0 0.0
    %195 = vmatpush.msra.mxu0 %v175
    %196 = vmatmul.f32.gmra.mxu0 %v178
    %v197 = vpop.f32.mrf.mxu0
    %v198 = vadd.f32 0.0, %v197
    %199 = vdwg.mxu0
    %200 = vrot.lane.b32.xlu0 %v84, 96
    %v201 = vpop.permute.xlu0 %200
    %v204 = vsel %vm145, %v173, 0
    %206 = vmatpush.msra.mxu0 0.0
    %207 = vmatpush.msra.mxu0 0.0
    %208 = vmatpush.msra.mxu0 0.0
    %209 = vmatpush.msra.mxu0 0.0
    %210 = vmatpush.msra.mxu0 0.0
    %211 = vmatpush.msra.mxu0 0.0
    %212 = vmatpush.msra.mxu0 0.0
    %213 = vmatpush.msra.mxu0 0.0
    %214 = vmatpush.msra.mxu0 0.0
    %215 = vmatpush.msra.mxu0 0.0
    %216 = vmatpush.msra.mxu0 0.0
    %217 = vmatpush.msra.mxu0 0.0
    %218 = vmatpush.msra.mxu0 0.0
    %219 = vmatpush.msra.mxu0 0.0
    %220 = vmatpush.msra.mxu0 0.0
    %221 = vmatpush.msra.mxu0 %v201
    %222 = vmatmul.f32.gmra.mxu0 %v204
    %v223 = vpop.f32.mrf.mxu0
    %v224 = vadd.f32 0.0, %v223
    %225 = vdwg.mxu0
    %v226 = vrot.slane %v198, 4
    %vm227 = vcmask 1047556
    %v228 = vsel %vm227, 0.0, %v226
    %v230 = vunpack.c.l.s4 1983009808
    %v231 = vunpack.c.0.s8 %v230
    %v232 = vperm.slane %v198, %v231
    %v234 = vunpack.c.l.s4 1983009808
    %v235 = vunpack.c.0.s8 %v234
    %v236 = vperm.slane %v228, %v235
    %v237 = vrot.slane %v224, 4
    %v238 = vsel %vm227, 0.0, %v237
    %v240 = vunpack.c.l.s4 1983009808
    %v241 = vunpack.c.0.s8 %v240
    %v242 = vperm.slane %v224, %v241
    %v244 = vunpack.c.l.s4 1983009808
    %v245 = vunpack.c.0.s8 %v244
    %v246 = vperm.slane %v238, %v245
    %v247 = vrot.slane %v242, 4
    %v248 = vsel %vm227, %v247, %v232
    %v249 = vrot.slane %v232, 4
    %v250 = vsel %vm227, %v242, %v249
    %v252 = vunpack.c.l.s4 1934713408
    %v253 = vunpack.c.0.s8 %v252
    %v254 = vperm.slane %v248, %v253
    %v256 = vunpack.c.l.s4 1934713408
    %v257 = vunpack.c.0.s8 %v256
    %v258 = vperm.slane %v250, %v257
    %v259 = vrot.slane %v246, 4
    %v260 = vsel %vm227, %v259, %v236
    %v261 = vrot.slane %v236, 4
    %v262 = vsel %vm227, %v246, %v261
    %v264 = vunpack.c.l.s4 1934713408
    %v265 = vunpack.c.0.s8 %v264
    %v266 = vperm.slane %v260, %v265
    %v268 = vunpack.c.l.s4 1934713408
    %v269 = vunpack.c.0.s8 %v268
    %v270 = vperm.slane %v262, %v269
    %v271 = vrot.slane %v254, 4
    %v272 = vsel %vm227, 0.0, %v271
    %v273 = vrot.slane %v258, 4
    %v274 = vsel %vm227, 0.0, %v273
    %v275 = vrot.slane %v266, 4
    %v276 = vsel %vm227, 0.0, %v275
    %v277 = vrot.slane %v270, 4
    %v278 = vsel %vm227, 0.0, %v277
    %280 = vrot.lane.b32.xlu0 %v272, 16
    %v281 = vpop.permute.xlu0 %280
    %284 = vrot.lane.b32.xlu0 %v258, 32
    %v285 = vpop.permute.xlu0 %284
    %288 = vrot.lane.b32.xlu0 %v274, 48
    %v289 = vpop.permute.xlu0 %288
    %292 = vrot.lane.b32.xlu0 %v266, 64
    %v293 = vpop.permute.xlu0 %292
    %296 = vrot.lane.b32.xlu0 %v276, 80
    %v297 = vpop.permute.xlu0 %296
    %300 = vrot.lane.b32.xlu0 %v270, 96
    %v301 = vpop.permute.xlu0 %300
    %304 = vrot.lane.b32.xlu0 %v278, 112
    %v305 = vpop.permute.xlu0 %304
    %v307 = vsel %vm91, %v254, %v281
    %v308 = vsel %vm56, %v307, %v285
    %vm309 = vcmask 392192
    %v310 = vsel %vm309, %v308, %v289
    %vm311 = vcmask 523264
    %v312 = vsel %vm311, %v310, %v293
    %vm313 = vcmask 654336
    %v314 = vsel %vm313, %v312, %v297
    %vm315 = vcmask 785408
    %v316 = vsel %vm315, %v314, %v301
    %vm317 = vcmask 916480
    %v318 = vsel %vm317, %v316, %v305
    %319 = vst [vmem:[%s3] sm:$0x3] %v318
    // Predicated region
    $region22: #{attention_head_fused.1} parent=1 // pred_check
      _
    $region23: #{attention_head_fused.1} parent=1 // pred_check_branch
      %321 = sbr.rel (0) target = $region25
    $region24: #{attention_head_fused.1} parent=1 // pred_region
      _
    $region25: #{attention_head_fused.1} parent=1 // pred_fallthru
      _
    // Predicated region
    $region26: #{attention_head_fused.1} parent=1 // pred_check
      _
    $region27: #{attention_head_fused.1} parent=1 // pred_check_branch
      %323 = sbr.rel (0) target = $region29
    $region28: #{attention_head_fused.1} parent=1 // pred_region
      _
    $region29: #{attention_head_fused.1} parent=1 // pred_fallthru
      _
    %324 = vsyncpa [#allocation3], 1
    %325 = vsyncpa [#allocation5], 1

</llo_original>
